<compile_context>
chip_gen: v7x
topology: tpu7x:2x2x1
jax: 0.10.0
libtpu: 0.0.40
codegen_flags: <defaults>
</compile_context>

<pallas_src>
import functools

import numpy as np
import jax
import jax.numpy as jnp
from jax import lax
from jax.experimental import pallas as pl
from jax.experimental.pallas import tpu as pltpu


def _cdiv(a, b):
    return -(-a // b)


def _round_up(a, b):
    return _cdiv(a, b) * b


def _log_K(type_loss):
    if type_loss == "laplacian":
        return float(np.log(2.0))
    return float(np.log(np.sqrt(2.0 * np.pi)))


@functools.lru_cache(maxsize=1)
def _vmem_caps():
    """(pipelining budget, vmem_limit ceiling) derived from the hardware."""
    try:
        cap = int(pltpu.get_tpu_info().vmem_capacity_bytes)
    except Exception:
        cap = 64 << 20                       # conservative (v7x per-TC capacity)
    budget = max(8 << 20, int(cap * 0.35))   # double-buffered working set
    limit_cap = max(32 << 20, int(cap * 0.75))
    return budget, limit_cap


def _as_compute_input(x):
    """Keep narrow float dtypes in HBM (upcast in-kernel); everything else -> f32."""
    x = jnp.asarray(x)
    if jnp.issubdtype(x.dtype, jnp.floating) and x.dtype.itemsize <= 4:
        return x
    return x.astype(jnp.float32)


def _pick_lane_width(n):
    """Lane-dense width (multiple of 128) that divides n exactly, or None."""
    for g in (2048, 1024, 512, 384, 256, 128):
        if g <= n and n % g == 0:
            return g
    return None


def _pick_row_tile(rows, per_row_pipelined_bytes, per_row_block_bytes, budget, align):
    cap = budget // max(per_row_pipelined_bytes, 1)
    cap = min(cap, (8 << 20) // max(per_row_block_bytes, 1))  # one block <= ~8 MiB
    tile = max(align, (cap // align) * align)
    return rows if rows <= tile else tile


def _loss(type_loss, t, m, inv_std, bias):
    diff = t - m
    if type_loss == "laplacian":
        return jnp.abs(diff) * inv_std + bias
    z = diff * inv_std
    return 0.5 * (z * z) + bias


def _read_mean(m_ref, mean_scalar):
    if mean_scalar:
        return m_ref[0, 0]
    return m_ref[...].astype(jnp.float32)


def _read_logstd(s_ref, logstd_scalar, K):
    if logstd_scalar:
        return s_ref[0, 0], s_ref[0, 1]        # (exp(-logstd), K + logstd) precomputed
    s = s_ref[...].astype(jnp.float32)
    return jnp.exp(-s), K + s                  # EUP exp; multiply instead of divide


def _make_elementwise_kernel(type_loss, mean_scalar, logstd_scalar):
    K = _log_K(type_loss)

    def kernel(t_ref, m_ref, s_ref, o_ref):
        t = t_ref[...].astype(jnp.float32)
        m = _read_mean(m_ref, mean_scalar)
        inv_std, bias = _read_logstd(s_ref, logstd_scalar, K)
        o_ref[...] = _loss(type_loss, t, m, inv_std, bias)

    return kernel


def _make_reduce_kernel(type_loss, reduction, mean_scalar, logstd_scalar,
                        d, tile_d, out_block):
    K = _log_K(type_loss)
    scale = np.float32(1.0 / d)
    mask_d = (d % tile_d) != 0

    def kernel(t_ref, m_ref, s_ref, o_ref):
        k = pl.program_id(1)

        @pl.when(k == 0)
        def _init():
            o_ref[...] = jnp.zeros_like(o_ref)

        t = t_ref[...].astype(jnp.float32)
        m = _read_mean(m_ref, mean_scalar)
        inv_std, bias = _read_logstd(s_ref, logstd_scalar, K)
        ret = _loss(type_loss, t, m, inv_std, bias)            # (tile_rows, tile_d)
        if mask_d:                                             # ragged last D tile
            col = k * tile_d + lax.broadcasted_iota(jnp.int32, ret.shape, 1)
            ret = jnp.where(col < d, ret, 0.0)
        red = jnp.sum(ret, axis=-1)                            # (tile_rows,)
        o_ref[...] += red.reshape(out_block)                   # lane-dense accumulate

        if reduction == "mean":
            @pl.when(k == pl.num_programs(1) - 1)
            def _finalize():
                o_ref[...] = o_ref[...] * scale

    return kernel


@functools.partial(jax.jit, static_argnames=("type_loss", "reduction"))
def reclosses_pallas(targets, mean=0.0, logstd=0.0, *, type_loss="gaussian",
                     reduction=None):
    targets = _as_compute_input(targets)
    mean = _as_compute_input(mean)
    logstd = _as_compute_input(logstd)
    shape = targets.shape
    K = _log_K(type_loss)
    budget, limit_cap = _vmem_caps()

    mean_scalar = mean.size == 1
    logstd_scalar = logstd.size == 1
    smem_spec = pl.BlockSpec(memory_space=pltpu.MemorySpace.SMEM)

    m_smem = mean.astype(jnp.float32).reshape(1, 1) if mean_scalar else None
    if logstd_scalar:
        s0 = logstd.astype(jnp.float32).reshape(())
        s_smem = jnp.stack([jnp.exp(-s0), K + s0]).reshape(1, 2)
    else:
        s_smem = None

    if reduction is None:
        # ---- pure elementwise: lane-dense (rows, g) view; pad only if unavoidable ----
        n = int(np.prod(shape, dtype=np.int64)) if len(shape) else 1
        g = _pick_lane_width(n)
        pad = 0
        if g is None:
            # TODO(synk): sizes with no 128-aligned factor still take one pad + slice pass.
            g = 1024
            pad = (-n) % g
        rows = (n + pad) // g

        stream_isz = [targets.dtype.itemsize]
        if not mean_scalar:
            stream_isz.append(mean.dtype.itemsize)
        if not logstd_scalar:
            stream_isz.append(logstd.dtype.itemsize)
        per_row_pipe = 2 * g * (sum(stream_isz) + 4)     # dbl-buffered inputs + f32 out
        tile_rows = _pick_row_tile(rows, per_row_pipe, g * 4, budget, align=8)
        if tile_rows >= rows and rows * g * 4 > (2 << 20):
            # >=2 grid steps so the "parallel" axis can feed both v7x TensorCores
            tile_rows = _round_up(_cdiv(rows, 2), 8)
        grid = (_cdiv(rows, tile_rows),)
        dim_sem = ("parallel",)

        def prep_full(x):
            # TODO(synk): non-scalar, non-full broadcast shapes (e.g. per-feature)
            # are still materialized here; they could stay small via a resident block.
            xf = jnp.broadcast_to(x, shape).reshape(-1)
            if pad:
                xf = jnp.pad(xf, (0, pad))
            return xf.reshape(rows, g)

        vspec = pl.BlockSpec((tile_rows, g), lambda i: (i, 0))
        operands = [prep_full(targets)]
        in_specs = [vspec]
        if mean_scalar:
            operands.append(m_smem); in_specs.append(smem_spec)
        else:
            operands.append(prep_full(mean)); in_specs.append(vspec)
        if logstd_scalar:
            operands.append(s_smem); in_specs.append(smem_spec)
        else:
            operands.append(prep_full(logstd)); in_specs.append(vspec)

        out_specs = pl.BlockSpec((tile_rows, g), lambda i: (i, 0))
        out_shape = jax.ShapeDtypeStruct((rows, g), jnp.float32)
        kernel = _make_elementwise_kernel(type_loss, mean_scalar, logstd_scalar)
        est = per_row_pipe * tile_rows
    else:
        # ---- last-axis reduction ----
        d = int(shape[-1])
        r = int(np.prod(shape[:-1], dtype=np.int64))
        d_pad = _round_up(d, 128)
        # TODO(synk): when d < 128 and 128 % d == 0, pack 128//d logical rows per
        # lane row to recover full lane utilization (matters most on v5e).

        def classify(x, scalar):
            if scalar:
                return "smem"
            if x.shape == shape:
                return "full"
            if x.size == d and x.ndim >= 1 and x.shape[-1] == d:
                return "row"            # per-feature, kept VMEM-resident
            return "bcast"              # TODO(synk): other broadcast shapes materialized

        mean_mode = classify(mean, mean_scalar)
        logstd_mode = classify(logstd, logstd_scalar)

        full_isz = [targets.dtype.itemsize]
        row_isz = []
        for x, mode in ((mean, mean_mode), (logstd, logstd_mode)):
            if mode in ("full", "bcast"):
                full_isz.append(x.dtype.itemsize)
            elif mode == "row":
                row_isz.append(x.dtype.itemsize)

        def footprint(tr, td_pad):
            b = sum(2 * tr * td_pad * isz for isz in full_isz)      # lane-padded width
            b += sum(2 * 8 * td_pad * isz for isz in row_isz)       # resident row blocks
            b += 2 * _round_up(tr, 1024) * 4                        # reduced output (tiny)
            return b

        tile_rows = tile_d = None
        for tr in ([r] if r <= 2048 else [2048, 1024]):
            if footprint(tr, d_pad) <= budget:
                tile_rows, tile_d = tr, d               # full-D block, single k step
                break
        if tile_rows is None:
            # wide last dim: tile D too, accumulate into the VMEM-resident output
            tile_rows = r if r <= 1024 else 1024
            per_col = (sum(2 * tile_rows * isz for isz in full_isz)
                       + sum(2 * 8 * isz for isz in row_isz))
            fixed = 2 * _round_up(tile_rows, 1024) * 4
            td = ((budget - fixed) // per_col) // 128 * 128
            tile_d = int(max(128, min(td, d_pad)))

        n_row_tiles = _cdiv(r, tile_rows)
        n_d_tiles = _cdiv(d, tile_d)
        grid = (n_row_tiles, n_d_tiles)
        dim_sem = ("parallel", "arbitrary")

        # Dense (k,128) output blocks (unmasked stores, full-tile writeback) whenever
        # several row tiles exist; otherwise the block equals the full output extent.
        if tile_rows % 1024 == 0:
            out_block = (tile_rows // 128, 128)
        else:
            out_block = (1, tile_rows)

        full_spec = pl.BlockSpec((tile_rows, tile_d), lambda i, k: (i, k))
        row_spec = pl.BlockSpec((1, tile_d), lambda i, k: (0, k))

        def prep(x, mode, smem_op):
            if mode == "smem":
                return smem_op, smem_spec
            if mode == "row":
                return x.reshape(1, d), row_spec
            if mode == "full":
                return x.reshape(r, d), full_spec
            return jnp.broadcast_to(x, shape).reshape(r, d), full_spec

        m_arr, m_spec = prep(mean, mean_mode, m_smem)
        s_arr, s_spec = prep(logstd, logstd_mode, s_smem)
        operands = [targets.reshape(r, d), m_arr, s_arr]
        in_specs = [full_spec, m_spec, s_spec]

        out_specs = pl.BlockSpec(out_block, lambda i, k: (i, 0))
        out_shape = jax.ShapeDtypeStruct((n_row_tiles * out_block[0], out_block[1]),
                                         jnp.float32)
        kernel = _make_reduce_kernel(type_loss, reduction, mean_scalar,
                                     logstd_scalar, d, tile_d, out_block)
        est = footprint(tile_rows, _round_up(tile_d, 128))

    vmem_limit = int(min(max(32 << 20, int(est * 1.4) + (1 << 20)), limit_cap))
    out = pl.pallas_call(
        kernel,
        out_shape=out_shape,
        grid=grid,
        in_specs=in_specs,
        out_specs=out_specs,
        compiler_params=pltpu.CompilerParams(
            dimension_semantics=dim_sem,
            vmem_limit_bytes=vmem_limit),
    )(*operands)

    if reduction is None:
        flat = out.reshape(-1)
        if pad:
            flat = flat[:n]
        return flat.reshape(shape)
    flat = out.reshape(-1)[:r]
    return flat.reshape(shape[:-1])


def _reference(targets, mean, logstd, type_loss, reduction):
    targets = jnp.asarray(targets, jnp.float32)
    mean = jnp.asarray(mean, jnp.float32)
    logstd = jnp.asarray(logstd, jnp.float32)
    if type_loss == "laplacian":
        ret = jnp.abs(targets - mean) / jnp.exp(logstd) + np.log(2.0) + logstd
    else:
        ret = 0.5 * ((targets - mean) / jnp.exp(logstd)) ** 2 \
            + np.log(np.sqrt(2.0 * np.pi)) + logstd
    if reduction is not None:
        ret = jnp.mean(ret, -1) if reduction == "mean" else jnp.sum(ret, -1)
    return ret


if __name__ == "__main__":
    key = jax.random.PRNGKey(0)
    k1, k2, k3 = jax.random.split(key, 3)

    B, S, D = 2, 8, 32
    targets = jax.random.normal(k1, (B, S, D), dtype=jnp.float32)
    mean_full = jax.random.normal(k2, (B, S, D), dtype=jnp.float32) * 0.5
    logstd_full = jax.random.normal(k3, (B, S, D), dtype=jnp.float32) * 0.1
    logstd_row = jax.random.normal(k3, (D,), dtype=jnp.float32) * 0.1

    cases = []

    # 1) elementwise, full mean/logstd (lane-dense view, no padding).
    out = jax.block_until_ready(reclosses_pallas(
        targets, mean_full, logstd_full, type_loss="gaussian", reduction=None))
    ref = _reference(targets, mean_full, logstd_full, "gaussian", None)
    cases.append(bool(jnp.allclose(out, ref, atol=1e-5, rtol=1e-5)))

    # 2) mean reduction, full mean + per-feature logstd (VMEM-resident row block).
    out = jax.block_until_ready(reclosses_pallas(
        targets, mean_full, logstd_row, type_loss="laplacian", reduction="mean"))
    ref = _reference(targets, mean_full, logstd_row, "laplacian", "mean")
    cases.append(bool(jnp.allclose(out, ref, atol=1e-5, rtol=1e-5)))

    # 3) module defaults (mean=0, logstd=0 -> SMEM scalars), sum reduction.
    out = jax.block_until_ready(reclosses_pallas(
        targets, type_loss="gaussian", reduction="sum"))
    ref = _reference(targets, 0.0, 0.0, "gaussian", "sum")
    cases.append(bool(jnp.allclose(out, ref, atol=1e-5, rtol=1e-5)))

    # 4) awkward flat size (600 elems, not 128-aligned) -> padded fallback, scalar params.
    t2 = jax.random.normal(k1, (3, 5, 40), dtype=jnp.float32)
    out = jax.block_until_ready(reclosses_pallas(
        t2, 0.25, -0.5, type_loss="gaussian", reduction=None))
    ref = _reference(t2, 0.25, -0.5, "gaussian", None)
    cases.append(bool(jnp.allclose(out, ref, atol=1e-5, rtol=1e-5)))

    print("KERNEL_OK" if all(cases) else "KERNEL_MISMATCH")
</pallas_src>

<mosaic_0001>
module attributes {stable_mosaic.version = 11 : i64} {
  func.func @kernel(%arg0: i32, %arg1: memref<1x512xf32, #tpu.memory_space<vmem>>, %arg2: memref<1x512xf32, #tpu.memory_space<vmem>>, %arg3: memref<1x512xf32, #tpu.memory_space<vmem>>, %arg4: memref<1x512xf32, #tpu.memory_space<vmem>>) attributes {dimension_semantics = [#tpu.dimension_semantics<parallel>], iteration_bounds = array<i64: 1>, scalar_prefetch = 0 : i64, scratch_operands = 0 : i64, tpu.core_type = #tpu.core_type<tc>, window_params = [{transform_indices = @transform_0, window_bounds = array<i64: 1, 512>}, {transform_indices = @transform_1, window_bounds = array<i64: 1, 512>}, {transform_indices = @transform_2, window_bounds = array<i64: 1, 512>}, {transform_indices = @transform_3, window_bounds = array<i64: 1, 512>}]} {
    %c0 = arith.constant 0 : index
    %c0_0 = arith.constant 0 : index
    %0 = vector.load %arg1[%c0, %c0_0] : memref<1x512xf32, #tpu.memory_space<vmem>>, vector<1x512xf32>
    %c0_1 = arith.constant 0 : index
    %c0_2 = arith.constant 0 : index
    %1 = vector.load %arg2[%c0_1, %c0_2] : memref<1x512xf32, #tpu.memory_space<vmem>>, vector<1x512xf32>
    %c0_3 = arith.constant 0 : index
    %c0_4 = arith.constant 0 : index
    %2 = vector.load %arg3[%c0_3, %c0_4] : memref<1x512xf32, #tpu.memory_space<vmem>>, vector<1x512xf32>
    %cst = arith.constant 0.000000e+00 : f32
    %3 = vector.broadcast %cst : f32 to vector<1x512xf32>
    %4 = arith.subf %3, %2 : vector<1x512xf32>
    %5 = math.exp %4 : vector<1x512xf32>
    %cst_5 = arith.constant 0.918938517 : f32
    %6 = vector.broadcast %cst_5 : f32 to vector<1x512xf32>
    %7 = arith.addf %6, %2 : vector<1x512xf32>
    %8 = arith.subf %0, %1 : vector<1x512xf32>
    %9 = arith.mulf %8, %5 : vector<1x512xf32>
    %10 = arith.mulf %9, %9 : vector<1x512xf32>
    %cst_6 = arith.constant 5.000000e-01 : f32
    %11 = vector.broadcast %cst_6 : f32 to vector<1x512xf32>
    %12 = arith.mulf %11, %10 : vector<1x512xf32>
    %13 = arith.addf %12, %7 : vector<1x512xf32>
    %c0_7 = arith.constant 0 : index
    %c0_8 = arith.constant 0 : index
    %14 = vector.load %arg4[%c0_7, %c0_8] : memref<1x512xf32, #tpu.memory_space<vmem>>, vector<1x512xf32>
    tpu.vector_store %arg4[%c0_7, %c0_8], %13 {strides = array<i32>} : memref<1x512xf32, #tpu.memory_space<vmem>>, vector<1x512xf32>,
    return
  }
  func.func @transform_0(%arg0: i32) -> (i32, i32) {
    %c0_i32 = arith.constant 0 : i32
    %c0_i32_0 = arith.constant 0 : i32
    return %arg0, %c0_i32 : i32, i32
  }
  func.func @transform_1(%arg0: i32) -> (i32, i32) {
    %c0_i32 = arith.constant 0 : i32
    %c0_i32_0 = arith.constant 0 : i32
    return %arg0, %c0_i32 : i32, i32
  }
  func.func @transform_2(%arg0: i32) -> (i32, i32) {
    %c0_i32 = arith.constant 0 : i32
    %c0_i32_0 = arith.constant 0 : i32
    return %arg0, %c0_i32 : i32, i32
  }
  func.func @transform_3(%arg0: i32) -> (i32, i32) {
    %c0_i32 = arith.constant 0 : i32
    %c0_i32_0 = arith.constant 0 : i32
    return %arg0, %c0_i32 : i32, i32
  }
}

</mosaic_0001>

<llo_original>
// kernel: reclosses_pallas.1
$region0: #{reclosses_pallas.1}
  #allocation0 [shape = 'u32[]', space=smem, size = 0x4, offset = 0x4, fixed_abs, tag = 'smem constant byte address 0x4 - core index']
  #allocation1 [shape = 'u32[144,128]{1,0:T(1,128)}', space=vmem, size = 0x12000, scoped, tag = 'internal scratch']
  %s0 = inlined_call_operand.vmem [shape: f32[1,512], index: 0, kind: input, shape index: {}]
  %s1 = inlined_call_operand.vmem [shape: f32[1,512], index: 1, kind: input, shape index: {}]
  %s2 = inlined_call_operand.vmem [shape: f32[1,512], index: 2, kind: input, shape index: {}]
  %s3 = inlined_call_operand.vmem [shape: f32[1,512], index: 3, kind: output, shape index: {}]
  %s4 = sld [smem:[#allocation0]]
  $region22: #{reclosses_pallas.1} parent=0
    _
  %s6 = ssub.s32 1, %s4
  %s7 = scalar_select 0, %s6, %s4
  // Predicated region
  $region2: #{reclosses_pallas.1} parent=0 // pred_check
    _
  $region3: #{reclosses_pallas.1} parent=0 // pred_check_branch
    %9 = sbr.rel (0) target = $region5
  $region4: #{reclosses_pallas.1} parent=0 // pred_region
    _
  $region5: #{reclosses_pallas.1} parent=0 // pred_fallthru
    _
  // Predicated region
  $region6: #{reclosses_pallas.1} parent=0 // pred_check
    _
  $region7: #{reclosses_pallas.1} parent=0 // pred_check_branch
    %11 = sbr.rel (0) target = $region9
  $region8: #{reclosses_pallas.1} parent=0 // pred_region
    _
  $region9: #{reclosses_pallas.1} parent=0 // pred_fallthru
    _
  // Predicated region
  $region10: #{reclosses_pallas.1} parent=0 // pred_check
    _
  $region11: #{reclosses_pallas.1} parent=0 // pred_check_branch
    %13 = sbr.rel (0) target = $region13
  $region12: #{reclosses_pallas.1} parent=0 // pred_region
    _
  $region13: #{reclosses_pallas.1} parent=0 // pred_fallthru
    _
  %v14 = vld [vmem:[%s0] sm:$0xf]
  %v15 = vld [vmem:[%s1] sm:$0xf]
  %v16 = vld [vmem:[%s2] sm:$0xf]
  %v17 = vsub.f32 0.0, %v16
  %v18 = vmul.f32 %v17, 1.442695
  %v19 = vpow.pop %v18
  %v20 = vadd.f32 %v16, 0.9189385
  %v21 = vsub.f32 %v14, %v15
  %v22 = vmul.f32 %v21, %v19
  %v23 = vmul.f32 %v22, %v22
  %v24 = vmul.f32 %v23, 0.5
  %v25 = vadd.f32 %v24, %v20
  %v26 = vlaneseq
  %vm27 = vcmp.ge.s32.totalorder %v26, 0
  %vm28 = vcmp.lt.s32.totalorder %v26, 512
  %vm29 = vmand %vm27, %vm28
  %30 = vst.msk [vmem:[%s3] sm:$0xf] %vm29, %v25
  // Predicated region
  $region14: #{reclosses_pallas.1} parent=0 // pred_check
    _
  $region15: #{reclosses_pallas.1} parent=0 // pred_check_branch
    %32 = sbr.rel (0) target = $region17
  $region16: #{reclosses_pallas.1} parent=0 // pred_region
    _
  $region17: #{reclosses_pallas.1} parent=0 // pred_fallthru
    _
  // Predicated region
  $region18: #{reclosses_pallas.1} parent=0 // pred_check
    _
  $region19: #{reclosses_pallas.1} parent=0 // pred_check_branch
    %34 = sbr.rel (0) target = $region21
  $region20: #{reclosses_pallas.1} parent=0 // pred_region
    _
  $region21: #{reclosses_pallas.1} parent=0 // pred_fallthru
    _

</llo_original>
